<compile_context>
chip_gen: v7x
topology: tpu7x:2x2x1
jax: 0.10.0
libtpu: 0.0.40
codegen_flags: <defaults>
</compile_context>

<pallas_src>
import jax
import jax.numpy as jnp
from jax import lax
from jax.experimental import pallas as pl
from jax.experimental.pallas import tpu as pltpu

input_size = 10
hidden_size = 20
output_size = 1

_SUB, _LANE = 8, 128
_TILE_B_CAP = 512          # v5e/v6e-friendly cap; budget check below protects v7x
_VMEM_BUDGET = 8 << 20     # bytes for (double-buffered x block + u scratch) per tile
_UNROLL_T_MAX = 32         # fully unroll the recurrence only for small static T


def _round_up(a, b):
    return ((a + b - 1) // b) * b


def simple_rnn_kernel(x_ref, wih_ref, whh_ref, b_ref, wfc_ref, bfc_ref,
                      out_ref, u_ref):
    """x_ref: (T, TILE_B, 128); weights padded to 128 lanes.

    out_ref: (TILE_B, 128); u_ref: VMEM scratch (T, TILE_B, 128) holding the
    hoisted per-timestep input projections.
    """
    T, tile_b, i_pad = x_ref.shape
    h_pad = whh_ref.shape[0]

    # --- (1) Hoisted input projection + folded bias: one big MXU pass --------
    # (T*TILE_B, 128) @ (128, 128): off the sequential critical path entirely.
    # Collapsing/expanding the leading axes is layout-free (TILE_B % 8 == 0).
    x_flat = x_ref[...].reshape(T * tile_b, i_pad)
    u_ref[...] = (jnp.dot(x_flat, wih_ref[...], preferred_element_type=jnp.float32)
                  + b_ref[...]).reshape(T, tile_b, h_pad)

    # --- (2) Sequential recurrence: only h @ W_hh + tanh remain per step -----
    # whh_ref is read at the dot site (weights are VMEM-resident; keeps live
    # ranges short instead of pinning a (128,128) value across the whole loop).
    def step(t, h):
        return jnp.tanh(u_ref[t]
                        + jnp.dot(h, whh_ref[...],
                                  preferred_element_type=jnp.float32))

    h = jnp.zeros((tile_b, h_pad), jnp.float32)
    if T <= _UNROLL_T_MAX:
        # Small static T: straight-line code, full LLO scheduling visibility.
        for t in range(T):
            h = step(t, h)
    else:
        # Long T: bounded code size / live ranges, partial unroll.
        h = lax.fori_loop(0, T, step, h, unroll=4)

    # --- (3) Final projection; 128-lane padded output -> unmasked lane-dense store.
    out_ref[...] = (jnp.dot(h, wfc_ref[...], preferred_element_type=jnp.float32)
                    + bfc_ref[...]).astype(out_ref.dtype)


def simple_rnn_forward(x, w_ih, b_ih, w_hh, b_hh, w_fc, b_fc):
    """SimpleRNN forward.

    x:    (B, T, input_size)            float
    w_ih: (input_size, hidden)          == torch rnn.weight_ih_l0.T
    b_ih: (hidden,)                     == torch rnn.bias_ih_l0
    w_hh: (hidden, hidden)              == torch rnn.weight_hh_l0.T
    b_hh: (hidden,)                     == torch rnn.bias_hh_l0
    w_fc: (hidden, output_size)         == torch fc.weight.T
    b_fc: (output_size,)                == torch fc.bias
    returns: (B, output_size)
    """
    f32 = jnp.float32
    B, T, I = x.shape
    H = w_ih.shape[1]
    O = w_fc.shape[1]

    I_pad = _round_up(max(I, _LANE), _LANE)
    H_pad = _round_up(max(H, _LANE), _LANE)
    O_pad = _round_up(max(O, _LANE), _LANE)

    # ---- Batch tiling ------------------------------------------------------
    # >= 2 tiles whenever B >= 16 so dimension_semantics=("parallel",) actually
    # shards across v7x's two TensorCores; cap at 512 rows (v5e/v6e have the
    # VMEM headroom, and bigger tiles amortize the ~0.35 us per-step overhead).
    if B < 16:
        TILE_B = _round_up(B, _SUB)
    else:
        TILE_B = min(_TILE_B_CAP, _round_up(-(-B // 2), _SUB))
    # VMEM budget: double-buffered x block (2x) + u scratch (1x), all
    # (T, TILE_B, 128) f32.  Keeps the tile comfortably inside the v7x 32 MiB
    # scoped default (and its 64 MiB physical VMEM).  For very long T the time
    # axis should become an extra "arbitrary" grid axis with h carried in
    # scratch; at this module's scale capping TILE_B is sufficient.
    bytes_per_row = 3 * T * _LANE * 4
    vmem_rows = max(_SUB, ((_VMEM_BUDGET // bytes_per_row) // _SUB) * _SUB)
    TILE_B = max(_SUB, min(TILE_B, vmem_rows))
    B_pad = _round_up(B, TILE_B)

    # Layout: time-major (T, B_pad, I_pad) so u[t] / x_ref[t] are cheap
    # leading-axis reads; last axis is the lane-dense (128) feature axis.
    # (For very large B*T this transpose+pad copy could be folded into an
    # XLA-side x-projection instead; negligible at this module's scale.)
    xt = jnp.transpose(x.astype(f32), (1, 0, 2))
    xt = jnp.pad(xt, ((0, 0), (0, B_pad - B), (0, I_pad - I)))

    # Zero-padded weight rows/cols + zero-padded biases keep padded hidden lanes
    # exactly 0 through the recurrence (tanh(0) = 0), so real lanes are untouched.
    wih_p = jnp.zeros((I_pad, H_pad), f32).at[:I, :H].set(w_ih.astype(f32))
    whh_p = jnp.zeros((H_pad, H_pad), f32).at[:H, :H].set(w_hh.astype(f32))
    b_p = jnp.zeros((1, H_pad), f32).at[0, :H].set((b_ih + b_hh).astype(f32))
    wfc_p = jnp.zeros((H_pad, O_pad), f32).at[:H, :O].set(w_fc.astype(f32))
    bfc_p = jnp.zeros((1, O_pad), f32).at[0, :O].set(b_fc.astype(f32))

    grid = (B_pad // TILE_B,)

    out_p = pl.pallas_call(
        simple_rnn_kernel,
        out_shape=jax.ShapeDtypeStruct((B_pad, O_pad), f32),
        grid_spec=pltpu.PrefetchScalarGridSpec(
            num_scalar_prefetch=0,
            grid=grid,
            in_specs=[
                pl.BlockSpec((T, TILE_B, I_pad), lambda i: (0, i, 0)),   # x (per batch tile)
                pl.BlockSpec((I_pad, H_pad), lambda i: (0, 0)),          # W_ih (broadcast)
                pl.BlockSpec((H_pad, H_pad), lambda i: (0, 0)),          # W_hh (broadcast)
                pl.BlockSpec((1, H_pad), lambda i: (0, 0)),              # b_ih + b_hh
                pl.BlockSpec((H_pad, O_pad), lambda i: (0, 0)),          # W_fc
                pl.BlockSpec((1, O_pad), lambda i: (0, 0)),              # b_fc
            ],
            out_specs=pl.BlockSpec((TILE_B, O_pad), lambda i: (i, 0)),
            scratch_shapes=[pltpu.VMEM((T, TILE_B, H_pad), f32)],        # u = x@W_ih + b
        ),
        compiler_params=pltpu.CompilerParams(
            dimension_semantics=("parallel",)),
    )(xt, wih_p, whh_p, b_p, wfc_p, bfc_p)

    return out_p[:B, :O]


def _rnn_reference(x, w_ih, b_ih, w_hh, b_hh, w_fc, b_fc):
    B, T, _ = x.shape
    H = w_hh.shape[0]
    h = jnp.zeros((B, H), jnp.float32)
    for t in range(T):
        h = jnp.tanh(x[:, t, :] @ w_ih + b_ih + h @ w_hh + b_hh)
    return h @ w_fc + b_fc


if __name__ == "__main__":
    key = jax.random.PRNGKey(0)
    k_x, k_wih, k_bih, k_whh, k_bhh, k_wfc, k_bfc, k_x2 = jax.random.split(key, 8)

    seq = 8
    std = 1.0 / (hidden_size ** 0.5)   # mimic torch nn.RNN init scale

    w_ih = std * jax.random.normal(k_wih, (input_size, hidden_size), jnp.float32)
    b_ih = std * jax.random.normal(k_bih, (hidden_size,), jnp.float32)
    w_hh = std * jax.random.normal(k_whh, (hidden_size, hidden_size), jnp.float32)
    b_hh = std * jax.random.normal(k_bhh, (hidden_size,), jnp.float32)
    w_fc = std * jax.random.normal(k_wfc, (hidden_size, output_size), jnp.float32)
    b_fc = std * jax.random.normal(k_bfc, (output_size,), jnp.float32)

    # --- case 1: tiny single-tile batch (grid=(1,)) --------------------------
    x = jax.random.normal(k_x, (2, seq, input_size), jnp.float32)
    out = simple_rnn_forward(x, w_ih, b_ih, w_hh, b_hh, w_fc, b_fc)
    jax.block_until_ready(out)
    ref = _rnn_reference(x, w_ih, b_ih, w_hh, b_hh, w_fc, b_fc)
    assert out.shape == (2, output_size), f"bad shape {out.shape}"
    assert jnp.allclose(out, ref, atol=1e-4, rtol=1e-4), "output mismatch (B=2)"

    # --- case 2: multi-tile batch (grid=(2,), padded batch rows) --------------
    x2 = jax.random.normal(k_x2, (43, seq, input_size), jnp.float32)
    out2 = simple_rnn_forward(x2, w_ih, b_ih, w_hh, b_hh, w_fc, b_fc)
    jax.block_until_ready(out2)
    ref2 = _rnn_reference(x2, w_ih, b_ih, w_hh, b_hh, w_fc, b_fc)
    assert out2.shape == (43, output_size), f"bad shape {out2.shape}"
    assert jnp.allclose(out2, ref2, atol=1e-4, rtol=1e-4), "output mismatch (B=43)"

    print("KERNEL_OK")
</pallas_src>

<mosaic_0001>
module attributes {stable_mosaic.version = 11 : i64} {
  func.func @simple_rnn_kernel(%arg0: i32, %arg1: memref<8x8x128xf32, #tpu.memory_space<vmem>>, %arg2: memref<128x128xf32, #tpu.memory_space<vmem>>, %arg3: memref<128x128xf32, #tpu.memory_space<vmem>>, %arg4: memref<1x128xf32, #tpu.memory_space<vmem>>, %arg5: memref<128x128xf32, #tpu.memory_space<vmem>>, %arg6: memref<1x128xf32, #tpu.memory_space<vmem>>, %arg7: memref<8x128xf32, #tpu.memory_space<vmem>>, %arg8: memref<8x8x128xf32, #tpu.memory_space<vmem>>) attributes {dimension_semantics = [#tpu.dimension_semantics<parallel>], iteration_bounds = array<i64: 1>, scalar_prefetch = 0 : i64, scratch_operands = 1 : i64, tpu.core_type = #tpu.core_type<tc>, window_params = [{transform_indices = @transform_0, window_bounds = array<i64: 8, 8, 128>}, {pipeline_mode = #tpu.pipeline_mode<synchronous>, transform_indices = @transform_1, window_bounds = array<i64: 128, 128>}, {pipeline_mode = #tpu.pipeline_mode<synchronous>, transform_indices = @transform_2, window_bounds = array<i64: 128, 128>}, {pipeline_mode = #tpu.pipeline_mode<synchronous>, transform_indices = @transform_3, window_bounds = array<i64: 1, 128>}, {pipeline_mode = #tpu.pipeline_mode<synchronous>, transform_indices = @transform_4, window_bounds = array<i64: 128, 128>}, {pipeline_mode = #tpu.pipeline_mode<synchronous>, transform_indices = @transform_5, window_bounds = array<i64: 1, 128>}, {transform_indices = @transform_6, window_bounds = array<i64: 8, 128>}]} {
    %c0 = arith.constant 0 : index
    %c0_0 = arith.constant 0 : index
    %c0_1 = arith.constant 0 : index
    %0 = vector.load %arg1[%c0, %c0_0, %c0_1] : memref<8x8x128xf32, #tpu.memory_space<vmem>>, vector<8x8x128xf32>
    %1 = vector.shape_cast %0 : vector<8x8x128xf32> to vector<64x128xf32>
    %c0_2 = arith.constant 0 : index
    %c0_3 = arith.constant 0 : index
    %2 = vector.load %arg2[%c0_2, %c0_3] : memref<128x128xf32, #tpu.memory_space<vmem>>, vector<128x128xf32>
    %cst = arith.constant dense<0.000000e+00> : vector<64x128xf32>
    %3 = tpu.matmul %1, %2, %cst {dimension_numbers = #tpu.dot_dimension_numbers<[1], [0], [0], [1], [0, 0, 1, 1], [], []>} : vector<64x128xf32>, vector<128x128xf32>, vector<64x128xf32> -> vector<64x128xf32>
    %c0_4 = arith.constant 0 : index
    %c0_5 = arith.constant 0 : index
    %4 = vector.load %arg4[%c0_4, %c0_5] : memref<1x128xf32, #tpu.memory_space<vmem>>, vector<1x128xf32>
    %5 = vector.broadcast %4 : vector<1x128xf32> to vector<64x128xf32>
    %6 = arith.addf %3, %5 : vector<64x128xf32>
    %7 = vector.shape_cast %6 : vector<64x128xf32> to vector<8x8x128xf32>
    %c0_6 = arith.constant 0 : index
    %c0_7 = arith.constant 0 : index
    %c0_8 = arith.constant 0 : index
    %8 = vector.load %arg8[%c0_6, %c0_7, %c0_8] : memref<8x8x128xf32, #tpu.memory_space<vmem>>, vector<8x8x128xf32>
    tpu.vector_store %arg8[%c0_6, %c0_7, %c0_8], %7 {strides = array<i32>} : memref<8x8x128xf32, #tpu.memory_space<vmem>>, vector<8x8x128xf32>,
    %cst_9 = arith.constant 0.000000e+00 : f32
    %9 = vector.broadcast %cst_9 : f32 to vector<8x128xf32>
    %c0_10 = arith.constant 0 : index
    %c0_11 = arith.constant 0 : index
    %c0_12 = arith.constant 0 : index
    %10 = vector.load %arg8[%c0_10, %c0_11, %c0_12] : memref<8x8x128xf32, #tpu.memory_space<vmem>>, vector<1x8x128xf32>
    %11 = vector.shape_cast %10 : vector<1x8x128xf32> to vector<8x128xf32>
    %c0_13 = arith.constant 0 : index
    %c0_14 = arith.constant 0 : index
    %12 = vector.load %arg3[%c0_13, %c0_14] : memref<128x128xf32, #tpu.memory_space<vmem>>, vector<128x128xf32>
    %cst_15 = arith.constant dense<0.000000e+00> : vector<8x128xf32>
    %13 = tpu.matmul %9, %12, %cst_15 {dimension_numbers = #tpu.dot_dimension_numbers<[1], [0], [0], [1], [0, 0, 1, 1], [], []>} : vector<8x128xf32>, vector<128x128xf32>, vector<8x128xf32> -> vector<8x128xf32>
    %14 = arith.addf %11, %13 : vector<8x128xf32>
    %15 = math.tanh %14 : vector<8x128xf32>
    %c1 = arith.constant 1 : index
    %c0_16 = arith.constant 0 : index
    %c0_17 = arith.constant 0 : index
    %16 = vector.load %arg8[%c1, %c0_16, %c0_17] : memref<8x8x128xf32, #tpu.memory_space<vmem>>, vector<1x8x128xf32>
    %17 = vector.shape_cast %16 : vector<1x8x128xf32> to vector<8x128xf32>
    %c0_18 = arith.constant 0 : index
    %c0_19 = arith.constant 0 : index
    %18 = vector.load %arg3[%c0_18, %c0_19] : memref<128x128xf32, #tpu.memory_space<vmem>>, vector<128x128xf32>
    %cst_20 = arith.constant dense<0.000000e+00> : vector<8x128xf32>
    %19 = tpu.matmul %15, %18, %cst_20 {dimension_numbers = #tpu.dot_dimension_numbers<[1], [0], [0], [1], [0, 0, 1, 1], [], []>} : vector<8x128xf32>, vector<128x128xf32>, vector<8x128xf32> -> vector<8x128xf32>
    %20 = arith.addf %17, %19 : vector<8x128xf32>
    %21 = math.tanh %20 : vector<8x128xf32>
    %c2 = arith.constant 2 : index
    %c0_21 = arith.constant 0 : index
    %c0_22 = arith.constant 0 : index
    %22 = vector.load %arg8[%c2, %c0_21, %c0_22] : memref<8x8x128xf32, #tpu.memory_space<vmem>>, vector<1x8x128xf32>
    %23 = vector.shape_cast %22 : vector<1x8x128xf32> to vector<8x128xf32>
    %c0_23 = arith.constant 0 : index
    %c0_24 = arith.constant 0 : index
    %24 = vector.load %arg3[%c0_23, %c0_24] : memref<128x128xf32, #tpu.memory_space<vmem>>, vector<128x128xf32>
    %cst_25 = arith.constant dense<0.000000e+00> : vector<8x128xf32>
    %25 = tpu.matmul %21, %24, %cst_25 {dimension_numbers = #tpu.dot_dimension_numbers<[1], [0], [0], [1], [0, 0, 1, 1], [], []>} : vector<8x128xf32>, vector<128x128xf32>, vector<8x128xf32> -> vector<8x128xf32>
    %26 = arith.addf %23, %25 : vector<8x128xf32>
    %27 = math.tanh %26 : vector<8x128xf32>
    %c3 = arith.constant 3 : index
    %c0_26 = arith.constant 0 : index
    %c0_27 = arith.constant 0 : index
    %28 = vector.load %arg8[%c3, %c0_26, %c0_27] : memref<8x8x128xf32, #tpu.memory_space<vmem>>, vector<1x8x128xf32>
    %29 = vector.shape_cast %28 : vector<1x8x128xf32> to vector<8x128xf32>
    %c0_28 = arith.constant 0 : index
    %c0_29 = arith.constant 0 : index
    %30 = vector.load %arg3[%c0_28, %c0_29] : memref<128x128xf32, #tpu.memory_space<vmem>>, vector<128x128xf32>
    %cst_30 = arith.constant dense<0.000000e+00> : vector<8x128xf32>
    %31 = tpu.matmul %27, %30, %cst_30 {dimension_numbers = #tpu.dot_dimension_numbers<[1], [0], [0], [1], [0, 0, 1, 1], [], []>} : vector<8x128xf32>, vector<128x128xf32>, vector<8x128xf32> -> vector<8x128xf32>
    %32 = arith.addf %29, %31 : vector<8x128xf32>
    %33 = math.tanh %32 : vector<8x128xf32>
    %c4 = arith.constant 4 : index
    %c0_31 = arith.constant 0 : index
    %c0_32 = arith.constant 0 : index
    %34 = vector.load %arg8[%c4, %c0_31, %c0_32] : memref<8x8x128xf32, #tpu.memory_space<vmem>>, vector<1x8x128xf32>
    %35 = vector.shape_cast %34 : vector<1x8x128xf32> to vector<8x128xf32>
    %c0_33 = arith.constant 0 : index
    %c0_34 = arith.constant 0 : index
    %36 = vector.load %arg3[%c0_33, %c0_34] : memref<128x128xf32, #tpu.memory_space<vmem>>, vector<128x128xf32>
    %cst_35 = arith.constant dense<0.000000e+00> : vector<8x128xf32>
    %37 = tpu.matmul %33, %36, %cst_35 {dimension_numbers = #tpu.dot_dimension_numbers<[1], [0], [0], [1], [0, 0, 1, 1], [], []>} : vector<8x128xf32>, vector<128x128xf32>, vector<8x128xf32> -> vector<8x128xf32>
    %38 = arith.addf %35, %37 : vector<8x128xf32>
    %39 = math.tanh %38 : vector<8x128xf32>
    %c5 = arith.constant 5 : index
    %c0_36 = arith.constant 0 : index
    %c0_37 = arith.constant 0 : index
    %40 = vector.load %arg8[%c5, %c0_36, %c0_37] : memref<8x8x128xf32, #tpu.memory_space<vmem>>, vector<1x8x128xf32>
    %41 = vector.shape_cast %40 : vector<1x8x128xf32> to vector<8x128xf32>
    %c0_38 = arith.constant 0 : index
    %c0_39 = arith.constant 0 : index
    %42 = vector.load %arg3[%c0_38, %c0_39] : memref<128x128xf32, #tpu.memory_space<vmem>>, vector<128x128xf32>
    %cst_40 = arith.constant dense<0.000000e+00> : vector<8x128xf32>
    %43 = tpu.matmul %39, %42, %cst_40 {dimension_numbers = #tpu.dot_dimension_numbers<[1], [0], [0], [1], [0, 0, 1, 1], [], []>} : vector<8x128xf32>, vector<128x128xf32>, vector<8x128xf32> -> vector<8x128xf32>
    %44 = arith.addf %41, %43 : vector<8x128xf32>
    %45 = math.tanh %44 : vector<8x128xf32>
    %c6 = arith.constant 6 : index
    %c0_41 = arith.constant 0 : index
    %c0_42 = arith.constant 0 : index
    %46 = vector.load %arg8[%c6, %c0_41, %c0_42] : memref<8x8x128xf32, #tpu.memory_space<vmem>>, vector<1x8x128xf32>
    %47 = vector.shape_cast %46 : vector<1x8x128xf32> to vector<8x128xf32>
    %c0_43 = arith.constant 0 : index
    %c0_44 = arith.constant 0 : index
    %48 = vector.load %arg3[%c0_43, %c0_44] : memref<128x128xf32, #tpu.memory_space<vmem>>, vector<128x128xf32>
    %cst_45 = arith.constant dense<0.000000e+00> : vector<8x128xf32>
    %49 = tpu.matmul %45, %48, %cst_45 {dimension_numbers = #tpu.dot_dimension_numbers<[1], [0], [0], [1], [0, 0, 1, 1], [], []>} : vector<8x128xf32>, vector<128x128xf32>, vector<8x128xf32> -> vector<8x128xf32>
    %50 = arith.addf %47, %49 : vector<8x128xf32>
    %51 = math.tanh %50 : vector<8x128xf32>
    %c7 = arith.constant 7 : index
    %c0_46 = arith.constant 0 : index
    %c0_47 = arith.constant 0 : index
    %52 = vector.load %arg8[%c7, %c0_46, %c0_47] : memref<8x8x128xf32, #tpu.memory_space<vmem>>, vector<1x8x128xf32>
    %53 = vector.shape_cast %52 : vector<1x8x128xf32> to vector<8x128xf32>
    %c0_48 = arith.constant 0 : index
    %c0_49 = arith.constant 0 : index
    %54 = vector.load %arg3[%c0_48, %c0_49] : memref<128x128xf32, #tpu.memory_space<vmem>>, vector<128x128xf32>
    %cst_50 = arith.constant dense<0.000000e+00> : vector<8x128xf32>
    %55 = tpu.matmul %51, %54, %cst_50 {dimension_numbers = #tpu.dot_dimension_numbers<[1], [0], [0], [1], [0, 0, 1, 1], [], []>} : vector<8x128xf32>, vector<128x128xf32>, vector<8x128xf32> -> vector<8x128xf32>
    %56 = arith.addf %53, %55 : vector<8x128xf32>
    %57 = math.tanh %56 : vector<8x128xf32>
    %c0_51 = arith.constant 0 : index
    %c0_52 = arith.constant 0 : index
    %58 = vector.load %arg5[%c0_51, %c0_52] : memref<128x128xf32, #tpu.memory_space<vmem>>, vector<128x128xf32>
    %cst_53 = arith.constant dense<0.000000e+00> : vector<8x128xf32>
    %59 = tpu.matmul %57, %58, %cst_53 {dimension_numbers = #tpu.dot_dimension_numbers<[1], [0], [0], [1], [0, 0, 1, 1], [], []>} : vector<8x128xf32>, vector<128x128xf32>, vector<8x128xf32> -> vector<8x128xf32>
    %c0_54 = arith.constant 0 : index
    %c0_55 = arith.constant 0 : index
    %60 = vector.load %arg6[%c0_54, %c0_55] : memref<1x128xf32, #tpu.memory_space<vmem>>, vector<1x128xf32>
    %61 = vector.broadcast %60 : vector<1x128xf32> to vector<8x128xf32>
    %62 = arith.addf %59, %61 : vector<8x128xf32>
    %c0_56 = arith.constant 0 : index
    %c0_57 = arith.constant 0 : index
    %63 = vector.load %arg7[%c0_56, %c0_57] : memref<8x128xf32, #tpu.memory_space<vmem>>, vector<8x128xf32>
    tpu.vector_store %arg7[%c0_56, %c0_57], %62 {strides = array<i32>} : memref<8x128xf32, #tpu.memory_space<vmem>>, vector<8x128xf32>,
    return
  }
  func.func @transform_0(%arg0: i32) -> (i32, i32, i32) {
    %c0_i32 = arith.constant 0 : i32
    %c0_i32_0 = arith.constant 0 : i32
    %c0_i32_1 = arith.constant 0 : i32
    return %c0_i32, %arg0, %c0_i32_0 : i32, i32, i32
  }
  func.func @transform_1(%arg0: i32) -> (i32, i32) {
    %c0_i32 = arith.constant 0 : i32
    %c0_i32_0 = arith.constant 0 : i32
    %c0_i32_1 = arith.constant 0 : i32
    return %c0_i32, %c0_i32_0 : i32, i32
  }
  func.func @transform_2(%arg0: i32) -> (i32, i32) {
    %c0_i32 = arith.constant 0 : i32
    %c0_i32_0 = arith.constant 0 : i32
    %c0_i32_1 = arith.constant 0 : i32
    return %c0_i32, %c0_i32_0 : i32, i32
  }
  func.func @transform_3(%arg0: i32) -> (i32, i32) {
    %c0_i32 = arith.constant 0 : i32
    %c0_i32_0 = arith.constant 0 : i32
    %c0_i32_1 = arith.constant 0 : i32
    return %c0_i32, %c0_i32_0 : i32, i32
  }
  func.func @transform_4(%arg0: i32) -> (i32, i32) {
    %c0_i32 = arith.constant 0 : i32
    %c0_i32_0 = arith.constant 0 : i32
    %c0_i32_1 = arith.constant 0 : i32
    return %c0_i32, %c0_i32_0 : i32, i32
  }
  func.func @transform_5(%arg0: i32) -> (i32, i32) {
    %c0_i32 = arith.constant 0 : i32
    %c0_i32_0 = arith.constant 0 : i32
    %c0_i32_1 = arith.constant 0 : i32
    return %c0_i32, %c0_i32_0 : i32, i32
  }
  func.func @transform_6(%arg0: i32) -> (i32, i32) {
    %c0_i32 = arith.constant 0 : i32
    %c0_i32_0 = arith.constant 0 : i32
    return %arg0, %c0_i32 : i32, i32
  }
}

</mosaic_0001>

<llo_original>
// kernel: tpu_custom_call.1
$region0: #{tpu_custom_call.1}
  #allocation0 [shape = 'u32[]', space=smem, size = 0x4, offset = 0x4, fixed_abs, tag = 'smem constant byte address 0x4 - core index']
  #allocation1 [shape = 'u32[144,128]{1,0:T(1,128)}', space=vmem, size = 0x12000, scoped, tag = 'internal scratch']
  #allocation2 [shape = 'f32[8,8,128]{2,1,0:T(8,128)}', space=vmem, size = 0x8000, scoped, tag = 'scratch operand']
  %s0 = inlined_call_operand.hbm [shape: f32[8,8,128], index: 0, kind: input, shape index: {}]
  %s1 = inlined_call_operand.hbm [shape: f32[128,128], index: 1, kind: input, shape index: {}]
  %s2 = inlined_call_operand.hbm [shape: f32[128,128], index: 2, kind: input, shape index: {}]
  %s3 = inlined_call_operand.vmem [shape: f32[1,128], index: 3, kind: input, shape index: {}]
  %s4 = inlined_call_operand.hbm [shape: f32[128,128], index: 4, kind: input, shape index: {}]
  %s5 = inlined_call_operand.vmem [shape: f32[1,128], index: 5, kind: input, shape index: {}]
  %s6 = inlined_call_operand.hbm [shape: f32[8,128], index: 6, kind: output, shape index: {}]
  %s7 = sld [smem:[#allocation0]]
  $region50: #{tpu_custom_call.1} parent=0
    _
  %s9 = ssub.s32 1, %s7
  %s10 = scalar_select 0, %s9, %s7
  $region1: #{tpu_custom_call.1} parent=0
    #allocation3 [shape = 'u8[32768]{0}', space=vmem, size = 0x8000, scoped, tag = 'input window, operand 0, single buffered']
    #allocation4 [shape = 's32[1]{0}', space=sflag, size = 0x4, scoped, tag = 'scoped memory for tpu_custom_call.1']
    #allocation5 [shape = 's32[1]{0}', space=sflag, size = 0x4, scoped, tag = 'scoped memory for tpu_custom_call.1']
    #allocation6 [shape = 'u8[65536]{0}', space=vmem, size = 0x10000, scoped, tag = 'input window, operand 1, single buffered']
    #allocation7 [shape = 's32[1]{0}', space=sflag, size = 0x4, scoped, tag = 'scoped memory for tpu_custom_call.1']
    #allocation8 [shape = 'u8[65536]{0}', space=vmem, size = 0x10000, scoped, tag = 'input window, operand 2, single buffered']
    #allocation9 [shape = 'u8[65536]{0}', space=vmem, size = 0x10000, scoped, tag = 'input window, operand 4, single buffered']
    #allocation10 [shape = 's32[1]{0}', space=sflag, size = 0x4, scoped, tag = 'scoped memory for tpu_custom_call.1']
    #allocation11 [shape = 'u8[4096]{0}', space=vmem, size = 0x1000, scoped, tag = 'output window, operand 0, single buffered']
    %11 = vsyncpa [#allocation4], 0
    %12 = vsyncpa [#allocation7], 0
    %13 = vsyncpa [#allocation10], 0
    %14 = vsyncpa [#allocation5], 0
    // Predicated region
    $region2: #{tpu_custom_call.1} parent=1 // pred_check
      _
    $region3: #{tpu_custom_call.1} parent=1 // pred_check_branch
      %16 = sbr.rel (0) target = $region5
    $region4: #{tpu_custom_call.1} parent=1 // pred_region
      %s18 = ssub.s32 1024, 1024
      %19 = vsyncadd [#allocation4], %s18
      %s20 = sshll.u32 [#allocation3], 4
      %s21 = int_to_ptr.vmem [resolvable:$true] %s20
      %26 = dma.hbm_to_vmem [thread:$0]  %s0, 1024, %s21, [#allocation4], 128, 128, 8
    $region5: #{tpu_custom_call.1} parent=1 // pred_fallthru
      _
    // Predicated region
    $region6: #{tpu_custom_call.1} parent=1 // pred_check
      _
    $region7: #{tpu_custom_call.1} parent=1 // pred_check_branch
      %28 = sbr.rel (0) target = $region9
    $region8: #{tpu_custom_call.1} parent=1 // pred_region
      %s30 = ssub.s32 2048, 2048
      %31 = vsyncadd [#allocation7], %s30
      %s32 = sshll.u32 [#allocation6], 4
      %s33 = int_to_ptr.vmem [resolvable:$true] %s32
      %38 = dma.hbm_to_vmem [thread:$0]  %s1, 2048, %s33, [#allocation7], 128, 128, 8
    $region9: #{tpu_custom_call.1} parent=1 // pred_fallthru
      _
    // Predicated region
    $region10: #{tpu_custom_call.1} parent=1 // pred_check
      _
    $region11: #{tpu_custom_call.1} parent=1 // pred_check_branch
      %40 = sbr.rel (0) target = $region13
    $region12: #{tpu_custom_call.1} parent=1 // pred_region
      %s42 = ssub.s32 2048, 2048
      %43 = vsyncadd [#allocation7], %s42
      %s44 = sshll.u32 [#allocation8], 4
      %s45 = int_to_ptr.vmem [resolvable:$true] %s44
      %50 = dma.hbm_to_vmem [thread:$0]  %s2, 2048, %s45, [#allocation7], 128, 128, 8
    $region13: #{tpu_custom_call.1} parent=1 // pred_fallthru
      _
    // Predicated region
    $region14: #{tpu_custom_call.1} parent=1 // pred_check
      _
    $region15: #{tpu_custom_call.1} parent=1 // pred_check_branch
      %52 = sbr.rel (0) target = $region17
    $region16: #{tpu_custom_call.1} parent=1 // pred_region
      _
    $region17: #{tpu_custom_call.1} parent=1 // pred_fallthru
      _
    // Predicated region
    $region18: #{tpu_custom_call.1} parent=1 // pred_check
      _
    $region19: #{tpu_custom_call.1} parent=1 // pred_check_branch
      %54 = sbr.rel (0) target = $region21
    $region20: #{tpu_custom_call.1} parent=1 // pred_region
      %s56 = ssub.s32 2048, 2048
      %57 = vsyncadd [#allocation10], %s56
      %s58 = sshll.u32 [#allocation9], 4
      %s59 = int_to_ptr.vmem [resolvable:$true] %s58
      %64 = dma.hbm_to_vmem [thread:$0]  %s4, 2048, %s59, [#allocation10], 128, 128, 8
    $region21: #{tpu_custom_call.1} parent=1 // pred_fallthru
      _
    // Predicated region
    $region22: #{tpu_custom_call.1} parent=1 // pred_check
      _
    $region23: #{tpu_custom_call.1} parent=1 // pred_check_branch
      %66 = sbr.rel (0) target = $region25
    $region24: #{tpu_custom_call.1} parent=1 // pred_region
      _
    $region25: #{tpu_custom_call.1} parent=1 // pred_fallthru
      _
    // Predicated region
    $region26: #{tpu_custom_call.1} parent=1 // pred_check
      _
    $region27: #{tpu_custom_call.1} parent=1 // pred_check_branch
      %68 = sbr.rel (0) target = $region29
    $region28: #{tpu_custom_call.1} parent=1 // pred_region
      %69 = dma.done [#allocation4], 1024
    $region29: #{tpu_custom_call.1} parent=1 // pred_fallthru
      _
    // Predicated region
    $region30: #{tpu_custom_call.1} parent=1 // pred_check
      _
    $region31: #{tpu_custom_call.1} parent=1 // pred_check_branch
      %71 = sbr.rel (0) target = $region33
    $region32: #{tpu_custom_call.1} parent=1 // pred_region
      %72 = dma.done [#allocation7], 2048
    $region33: #{tpu_custom_call.1} parent=1 // pred_fallthru
      _
    // Predicated region
    $region34: #{tpu_custom_call.1} parent=1 // pred_check
      _
    $region35: #{tpu_custom_call.1} parent=1 // pred_check_branch
      %74 = sbr.rel (0) target = $region37
    $region36: #{tpu_custom_call.1} parent=1 // pred_region
      %75 = dma.done [#allocation7], 2048
    $region37: #{tpu_custom_call.1} parent=1 // pred_fallthru
      _
    // Predicated region
    $region38: #{tpu_custom_call.1} parent=1 // pred_check
      _
    $region39: #{tpu_custom_call.1} parent=1 // pred_check_branch
      %77 = sbr.rel (0) target = $region41
    $region40: #{tpu_custom_call.1} parent=1 // pred_region
      %78 = dma.done [#allocation10], 2048
    $region41: #{tpu_custom_call.1} parent=1 // pred_fallthru
      _
    %v79 = vld [vmem:[#allocation3] sm:$0xff]
    %v80 = vld [vmem:[#allocation3 + $0x8] sm:$0xff]
    %v81 = vld [vmem:[#allocation3 + $0x10] sm:$0xff]
    %v82 = vld [vmem:[#allocation3 + $0x18] sm:$0xff]
    %v83 = vld [vmem:[#allocation3 + $0x20] sm:$0xff]
    %v84 = vld [vmem:[#allocation3 + $0x28] sm:$0xff]
    %v85 = vld [vmem:[#allocation3 + $0x30] sm:$0xff]
    %v86 = vld [vmem:[#allocation3 + $0x38] sm:$0xff]
    %v87 = vld [vmem:[#allocation6] sm:$0xff]
    %v88 = vld [vmem:[#allocation6 + $0x8] sm:$0xff]
    %v89 = vld [vmem:[#allocation6 + $0x10] sm:$0xff]
    %v90 = vld [vmem:[#allocation6 + $0x18] sm:$0xff]
    %v91 = vld [vmem:[#allocation6 + $0x20] sm:$0xff]
    %v92 = vld [vmem:[#allocation6 + $0x28] sm:$0xff]
    %v93 = vld [vmem:[#allocation6 + $0x30] sm:$0xff]
    %v94 = vld [vmem:[#allocation6 + $0x38] sm:$0xff]
    %v95 = vld [vmem:[#allocation6 + $0x40] sm:$0xff]
    %v96 = vld [vmem:[#allocation6 + $0x48] sm:$0xff]
    %v97 = vld [vmem:[#allocation6 + $0x50] sm:$0xff]
    %v98 = vld [vmem:[#allocation6 + $0x58] sm:$0xff]
    %v99 = vld [vmem:[#allocation6 + $0x60] sm:$0xff]
    %v100 = vld [vmem:[#allocation6 + $0x68] sm:$0xff]
    %v101 = vld [vmem:[#allocation6 + $0x70] sm:$0xff]
    %v102 = vld [vmem:[#allocation6 + $0x78] sm:$0xff]
    %v103 = vld [vmem:[%s3] sm:$0x1]
    %v105 = vlaneseq
    %v106 = vshrl.u32 %v105, 7
    %v107 = vsub.s32 0, %v106
    %v108 = vrot.slane %v103, %v107
    %110 = vmatprep.subr.mxu0 0.0
    %111 = vmatpush1.msra.mxu0 %v87
    %112 = vmatprep.subr.mxu0 0.0
    %113 = vmatpush1.msra.mxu0 %v88
    %114 = vmatprep.subr.mxu0 0.0
    %115 = vmatpush1.msra.mxu0 %v89
    %116 = vmatprep.subr.mxu0 0.0
    %117 = vmatpush1.msra.mxu0 %v90
    %118 = vmatprep.subr.mxu0 0.0
    %119 = vmatpush1.msra.mxu0 %v91
    %120 = vmatprep.subr.mxu0 0.0
    %121 = vmatpush1.msra.mxu0 %v92
    %122 = vmatprep.subr.mxu0 0.0
    %123 = vmatpush1.msra.mxu0 %v93
    %124 = vmatprep.subr.mxu0 0.0
    %125 = vmatpush1.msra.mxu0 %v94
    %126 = vmatprep.subr.mxu0 0.0
    %127 = vmatpush1.msra.mxu0 %v95
    %128 = vmatprep.subr.mxu0 0.0
    %129 = vmatpush1.msra.mxu0 %v96
    %130 = vmatprep.subr.mxu0 0.0
    %131 = vmatpush1.msra.mxu0 %v97
    %132 = vmatprep.subr.mxu0 0.0
    %133 = vmatpush1.msra.mxu0 %v98
    %134 = vmatprep.subr.mxu0 0.0
    %135 = vmatpush1.msra.mxu0 %v99
    %136 = vmatprep.subr.mxu0 0.0
    %137 = vmatpush1.msra.mxu0 %v100
    %138 = vmatprep.subr.mxu0 0.0
    %139 = vmatpush1.msra.mxu0 %v101
    %140 = vmatprep.subr.mxu0 0.0
    %141 = vmatpush1.msra.mxu0 %v102
    %142 = vmatprep.subr.mxu0 0.0
    %143 = vmatpush1.msra.mxu0 0.0
    %144 = vmatprep.subr.mxu0 0.0
    %145 = vmatpush1.msra.mxu0 0.0
    %146 = vmatprep.subr.mxu0 0.0
    %147 = vmatpush1.msra.mxu0 0.0
    %148 = vmatprep.subr.mxu0 0.0
    %149 = vmatpush1.msra.mxu0 0.0
    %150 = vmatprep.subr.mxu0 0.0
    %151 = vmatpush1.msra.mxu0 0.0
    %152 = vmatprep.subr.mxu0 0.0
    %153 = vmatpush1.msra.mxu0 0.0
    %154 = vmatprep.subr.mxu0 0.0
    %155 = vmatpush1.msra.mxu0 0.0
    %156 = vmatprep.subr.mxu0 0.0
    %157 = vmatpush1.msra.mxu0 0.0
    %158 = vmatprep.subr.mxu0 0.0
    %159 = vmatpush1.msra.mxu0 0.0
    %160 = vmatprep.subr.mxu0 0.0
    %161 = vmatpush1.msra.mxu0 0.0
    %162 = vmatprep.subr.mxu0 0.0
    %163 = vmatpush1.msra.mxu0 0.0
    %164 = vmatprep.subr.mxu0 0.0
    %165 = vmatpush1.msra.mxu0 0.0
    %166 = vmatprep.subr.mxu0 0.0
    %167 = vmatpush1.msra.mxu0 0.0
    %168 = vmatprep.subr.mxu0 0.0
    %169 = vmatpush1.msra.mxu0 0.0
    %170 = vmatprep.subr.mxu0 0.0
    %171 = vmatpush1.msra.mxu0 0.0
    %172 = vmatprep.subr.mxu0 0.0
    %173 = vmatpush1.msra.mxu0 0.0
    %174 = vmatprep.mubr.f32.mxu0 0.0
    %175 = vmatmul.mubr.f32.gmra.mrb[0].mxu0 %v79
    %v176 = vpop.f32.mrb[0].mxu0
    %v177 = vadd.f32 %v108, %v176
    %v178 = vpop.f32.mrb[0].mxu0
    %179 = vmatprep.mubr.f32.mxu0 0.0
    %180 = vmatmul.mubr.f32.gmra.mrb[0].mxu0 %v80
    %v181 = vpop.f32.mrb[0].mxu0
    %v182 = vadd.f32 %v108, %v181
    %v183 = vpop.f32.mrb[0].mxu0
    %184 = vmatprep.mubr.f32.mxu0 0.0
    %185 = vmatmul.mubr.f32.gmra.mrb[0].mxu0 %v81
    %v186 = vpop.f32.mrb[0].mxu0
    %v187 = vadd.f32 %v108, %v186
    %v188 = vpop.f32.mrb[0].mxu0
    %189 = vmatprep.mubr.f32.mxu0 0.0
    %190 = vmatmul.mubr.f32.gmra.mrb[0].mxu0 %v82
    %v191 = vpop.f32.mrb[0].mxu0
    %v192 = vadd.f32 %v108, %v191
    %v193 = vpop.f32.mrb[0].mxu0
    %194 = vmatprep.mubr.f32.mxu0 0.0
    %195 = vmatmul.mubr.f32.gmra.mrb[0].mxu0 %v83
    %v196 = vpop.f32.mrb[0].mxu0
    %v197 = vadd.f32 %v108, %v196
    %v198 = vpop.f32.mrb[0].mxu0
    %199 = vmatprep.mubr.f32.mxu0 0.0
    %200 = vmatmul.mubr.f32.gmra.mrb[0].mxu0 %v84
    %v201 = vpop.f32.mrb[0].mxu0
    %v202 = vadd.f32 %v108, %v201
    %v203 = vpop.f32.mrb[0].mxu0
    %204 = vmatprep.mubr.f32.mxu0 0.0
    %205 = vmatmul.mubr.f32.gmra.mrb[0].mxu0 %v85
    %v206 = vpop.f32.mrb[0].mxu0
    %v207 = vadd.f32 %v108, %v206
    %v208 = vpop.f32.mrb[0].mxu0
    %209 = vmatprep.mubr.f32.mxu0 0.0
    %210 = vmatmul.mubr.f32.gmra.mrb[0].mxu0 %v86
    %v211 = vpop.f32.mrb[0].mxu0
    %v212 = vadd.f32 %v108, %v211
    %v213 = vpop.f32.mrb[0].mxu0
    %214 = vdwg.mxu0
    %215 = vst [vmem:[#allocation2] sm:$0xff] %v177
    %216 = vst [vmem:[#allocation2 + $0x8] sm:$0xff] %v182
    %217 = vst [vmem:[#allocation2 + $0x10] sm:$0xff] %v187
    %218 = vst [vmem:[#allocation2 + $0x18] sm:$0xff] %v192
    %219 = vst [vmem:[#allocation2 + $0x20] sm:$0xff] %v197
    %220 = vst [vmem:[#allocation2 + $0x28] sm:$0xff] %v202
    %221 = vst [vmem:[#allocation2 + $0x30] sm:$0xff] %v207
    %222 = vst [vmem:[#allocation2 + $0x38] sm:$0xff] %v212
    %v223 = vld [vmem:[#allocation2] sm:$0xff]
    %v224 = vld [vmem:[#allocation8] sm:$0xff]
    %v225 = vld [vmem:[#allocation8 + $0x8] sm:$0xff]
    %v226 = vld [vmem:[#allocation8 + $0x10] sm:$0xff]
    %v227 = vld [vmem:[#allocation8 + $0x18] sm:$0xff]
    %v228 = vld [vmem:[#allocation8 + $0x20] sm:$0xff]
    %v229 = vld [vmem:[#allocation8 + $0x28] sm:$0xff]
    %v230 = vld [vmem:[#allocation8 + $0x30] sm:$0xff]
    %v231 = vld [vmem:[#allocation8 + $0x38] sm:$0xff]
    %v232 = vld [vmem:[#allocation8 + $0x40] sm:$0xff]
    %v233 = vld [vmem:[#allocation8 + $0x48] sm:$0xff]
    %v234 = vld [vmem:[#allocation8 + $0x50] sm:$0xff]
    %v235 = vld [vmem:[#allocation8 + $0x58] sm:$0xff]
    %v236 = vld [vmem:[#allocation8 + $0x60] sm:$0xff]
    %v237 = vld [vmem:[#allocation8 + $0x68] sm:$0xff]
    %v238 = vld [vmem:[#allocation8 + $0x70] sm:$0xff]
    %v239 = vld [vmem:[#allocation8 + $0x78] sm:$0xff]
    %240 = vmatprep.subr.mxu0 0.0
    %241 = vmatpush1.msra.mxu0 %v224
    %242 = vmatprep.subr.mxu0 0.0
    %243 = vmatpush1.msra.mxu0 %v225
    %244 = vmatprep.subr.mxu0 0.0
    %245 = vmatpush1.msra.mxu0 %v226
    %246 = vmatprep.subr.mxu0 0.0
    %247 = vmatpush1.msra.mxu0 %v227
    %248 = vmatprep.subr.mxu0 0.0
    %249 = vmatpush1.msra.mxu0 %v228
    %250 = vmatprep.subr.mxu0 0.0
    %251 = vmatpush1.msra.mxu0 %v229
    %252 = vmatprep.subr.mxu0 0.0
    %253 = vmatpush1.msra.mxu0 %v230
    %254 = vmatprep.subr.mxu0 0.0
    %255 = vmatpush1.msra.mxu0 %v231
    %256 = vmatprep.subr.mxu0 0.0
    %257 = vmatpush1.msra.mxu0 %v232
    %258 = vmatprep.subr.mxu0 0.0
    %259 = vmatpush1.msra.mxu0 %v233
    %260 = vmatprep.subr.mxu0 0.0
    %261 = vmatpush1.msra.mxu0 %v234
    %262 = vmatprep.subr.mxu0 0.0
    %263 = vmatpush1.msra.mxu0 %v235
    %264 = vmatprep.subr.mxu0 0.0
    %265 = vmatpush1.msra.mxu0 %v236
    %266 = vmatprep.subr.mxu0 0.0
    %267 = vmatpush1.msra.mxu0 %v237
    %268 = vmatprep.subr.mxu0 0.0
    %269 = vmatpush1.msra.mxu0 %v238
    %270 = vmatprep.subr.mxu0 0.0
    %271 = vmatpush1.msra.mxu0 %v239
    %272 = vmatprep.subr.mxu0 0.0
    %273 = vmatpush1.msra.mxu0 0.0
    %274 = vmatprep.subr.mxu0 0.0
    %275 = vmatpush1.msra.mxu0 0.0
    %276 = vmatprep.subr.mxu0 0.0
    %277 = vmatpush1.msra.mxu0 0.0
    %278 = vmatprep.subr.mxu0 0.0
    %279 = vmatpush1.msra.mxu0 0.0
    %280 = vmatprep.subr.mxu0 0.0
    %281 = vmatpush1.msra.mxu0 0.0
    %282 = vmatprep.subr.mxu0 0.0
    %283 = vmatpush1.msra.mxu0 0.0
    %284 = vmatprep.subr.mxu0 0.0
    %285 = vmatpush1.msra.mxu0 0.0
    %286 = vmatprep.subr.mxu0 0.0
    %287 = vmatpush1.msra.mxu0 0.0
    %288 = vmatprep.subr.mxu0 0.0
    %289 = vmatpush1.msra.mxu0 0.0
    %290 = vmatprep.subr.mxu0 0.0
    %291 = vmatpush1.msra.mxu0 0.0
    %292 = vmatprep.subr.mxu0 0.0
    %293 = vmatpush1.msra.mxu0 0.0
    %294 = vmatprep.subr.mxu0 0.0
    %295 = vmatpush1.msra.mxu0 0.0
    %296 = vmatprep.subr.mxu0 0.0
    %297 = vmatpush1.msra.mxu0 0.0
    %298 = vmatprep.subr.mxu0 0.0
    %299 = vmatpush1.msra.mxu0 0.0
    %300 = vmatprep.subr.mxu0 0.0
    %301 = vmatpush1.msra.mxu0 0.0
    %302 = vmatprep.subr.mxu0 0.0
    %303 = vmatpush1.msra.mxu0 0.0
    %304 = vmatprep.mubr.f32.mxu0 0.0
    %305 = vmatmul.mubr.f32.gmra.mrb[0].mxu0 0.0
    %v306 = vpop.f32.mrb[0].mxu0
    %v307 = vadd.f32 0.0, %v306
    %v308 = vpop.f32.mrb[0].mxu0
    %309 = vdwg.mxu0
    %v310 = vadd.f32 %v223, %v307
    %v311 = vtanh.pop %v310
    %s312 = scalar_lea.vmem [#allocation2], 8
    %v313 = vld [vmem:[%s312] sm:$0xff]
    %314 = vmatprep.subr.mxu0 0.0
    %315 = vmatpush1.msra.mxu0 %v224
    %316 = vmatprep.subr.mxu0 0.0
    %317 = vmatpush1.msra.mxu0 %v225
    %318 = vmatprep.subr.mxu0 0.0
    %319 = vmatpush1.msra.mxu0 %v226
    %320 = vmatprep.subr.mxu0 0.0
    %321 = vmatpush1.msra.mxu0 %v227
    %322 = vmatprep.subr.mxu0 0.0
    %323 = vmatpush1.msra.mxu0 %v228
    %324 = vmatprep.subr.mxu0 0.0
    %325 = vmatpush1.msra.mxu0 %v229
    %326 = vmatprep.subr.mxu0 0.0
    %327 = vmatpush1.msra.mxu0 %v230
    %328 = vmatprep.subr.mxu0 0.0
    %329 = vmatpush1.msra.mxu0 %v231
    %330 = vmatprep.subr.mxu0 0.0
    %331 = vmatpush1.msra.mxu0 %v232
    %332 = vmatprep.subr.mxu0 0.0
    %333 = vmatpush1.msra.mxu0 %v233
    %334 = vmatprep.subr.mxu0 0.0
    %335 = vmatpush1.msra.mxu0 %v234
    %336 = vmatprep.subr.mxu0 0.0
    %337 = vmatpush1.msra.mxu0 %v235
    %338 = vmatprep.subr.mxu0 0.0
    %339 = vmatpush1.msra.mxu0 %v236
    %340 = vmatprep.subr.mxu0 0.0
    %341 = vmatpush1.msra.mxu0 %v237
    %342 = vmatprep.subr.mxu0 0.0
    %343 = vmatpush1.msra.mxu0 %v238
    %344 = vmatprep.subr.mxu0 0.0
    %345 = vmatpush1.msra.mxu0 %v239
    %346 = vmatprep.subr.mxu0 0.0
    %347 = vmatpush1.msra.mxu0 0.0
    %348 = vmatprep.subr.mxu0 0.0
    %349 = vmatpush1.msra.mxu0 0.0
    %350 = vmatprep.subr.mxu0 0.0
    %351 = vmatpush1.msra.mxu0 0.0
    %352 = vmatprep.subr.mxu0 0.0
    %353 = vmatpush1.msra.mxu0 0.0
    %354 = vmatprep.subr.mxu0 0.0
    %355 = vmatpush1.msra.mxu0 0.0
    %356 = vmatprep.subr.mxu0 0.0
    %357 = vmatpush1.msra.mxu0 0.0
    %358 = vmatprep.subr.mxu0 0.0
    %359 = vmatpush1.msra.mxu0 0.0
    %360 = vmatprep.subr.mxu0 0.0
    %361 = vmatpush1.msra.mxu0 0.0
    %362 = vmatprep.subr.mxu0 0.0
    %363 = vmatpush1.msra.mxu0 0.0
    %364 = vmatprep.subr.mxu0 0.0
    %365 = vmatpush1.msra.mxu0 0.0
    %366 = vmatprep.subr.mxu0 0.0
    %367 = vmatpush1.msra.mxu0 0.0
    %368 = vmatprep.subr.mxu0 0.0
    %369 = vmatpush1.msra.mxu0 0.0
    %370 = vmatprep.subr.mxu0 0.0
    %371 = vmatpush1.msra.mxu0 0.0
    %372 = vmatprep.subr.mxu0 0.0
    %373 = vmatpush1.msra.mxu0 0.0
    %374 = vmatprep.subr.mxu0 0.0
    %375 = vmatpush1.msra.mxu0 0.0
    %376 = vmatprep.subr.mxu0 0.0
    %377 = vmatpush1.msra.mxu0 0.0
    %378 = vmatprep.mubr.f32.mxu0 0.0
    %379 = vmatmul.mubr.f32.gmra.mrb[0].mxu0 %v311
    %v380 = vpop.f32.mrb[0].mxu0
    %v381 = vadd.f32 0.0, %v380
    %v382 = vpop.f32.mrb[0].mxu0
    %383 = vdwg.mxu0
    %v384 = vadd.f32 %v313, %v381
    %v385 = vtanh.pop %v384
    %s386 = scalar_lea.vmem [#allocation2], 16
    %v387 = vld [vmem:[%s386] sm:$0xff]
    %388 = vmatprep.subr.mxu0 0.0
    %389 = vmatpush1.msra.mxu0 %v224
    %390 = vmatprep.subr.mxu0 0.0
    %391 = vmatpush1.msra.mxu0 %v225
    %392 = vmatprep.subr.mxu0 0.0
    %393 = vmatpush1.msra.mxu0 %v226
    %394 = vmatprep.subr.mxu0 0.0
    %395 = vmatpush1.msra.mxu0 %v227
    %396 = vmatprep.subr.mxu0 0.0
    %397 = vmatpush1.msra.mxu0 %v228
    %398 = vmatprep.subr.mxu0 0.0
    %399 = vmatpush1.msra.mxu0 %v229
    %400 = vmatprep.subr.mxu0 0.0
    %401 = vmatpush1.msra.mxu0 %v230
    %402 = vmatprep.subr.mxu0 0.0
    %403 = vmatpush1.msra.mxu0 %v231
    %404 = vmatprep.subr.mxu0 0.0
    %405 = vmatpush1.msra.mxu0 %v232
    %406 = vmatprep.subr.mxu0 0.0
    %407 = vmatpush1.msra.mxu0 %v233
    %408 = vmatprep.subr.mxu0 0.0
    %409 = vmatpush1.msra.mxu0 %v234
    %410 = vmatprep.subr.mxu0 0.0
    %411 = vmatpush1.msra.mxu0 %v235
    %412 = vmatprep.subr.mxu0 0.0
    %413 = vmatpush1.msra.mxu0 %v236
    %414 = vmatprep.subr.mxu0 0.0
    %415 = vmatpush1.msra.mxu0 %v237
    %416 = vmatprep.subr.mxu0 0.0
    %417 = vmatpush1.msra.mxu0 %v238
    %418 = vmatprep.subr.mxu0 0.0
    %419 = vmatpush1.msra.mxu0 %v239
    %420 = vmatprep.subr.mxu0 0.0
    %421 = vmatpush1.msra.mxu0 0.0
    %422 = vmatprep.subr.mxu0 0.0
    %423 = vmatpush1.msra.mxu0 0.0
    %424 = vmatprep.subr.mxu0 0.0
    %425 = vmatpush1.msra.mxu0 0.0
    %426 = vmatprep.subr.mxu0 0.0
    %427 = vmatpush1.msra.mxu0 0.0
    %428 = vmatprep.subr.mxu0 0.0
    %429 = vmatpush1.msra.mxu0 0.0
    %430 = vmatprep.subr.mxu0 0.0
    %431 = vmatpush1.msra.mxu0 0.0
    %432 = vmatprep.subr.mxu0 0.0
    %433 = vmatpush1.msra.mxu0 0.0
    %434 = vmatprep.subr.mxu0 0.0
    %435 = vmatpush1.msra.mxu0 0.0
    %436 = vmatprep.subr.mxu0 0.0
    %437 = vmatpush1.msra.mxu0 0.0
    %438 = vmatprep.subr.mxu0 0.0
    %439 = vmatpush1.msra.mxu0 0.0
    %440 = vmatprep.subr.mxu0 0.0
    %441 = vmatpush1.msra.mxu0 0.0
    %442 = vmatprep.subr.mxu0 0.0
    %443 = vmatpush1.msra.mxu0 0.0
    %444 = vmatprep.subr.mxu0 0.0
    %445 = vmatpush1.msra.mxu0 0.0
    %446 = vmatprep.subr.mxu0 0.0
    %447 = vmatpush1.msra.mxu0 0.0
    %448 = vmatprep.subr.mxu0 0.0
    %449 = vmatpush1.msra.mxu0 0.0
    %450 = vmatprep.subr.mxu0 0.0
    %451 = vmatpush1.msra.mxu0 0.0
    %452 = vmatprep.mubr.f32.mxu0 0.0
    %453 = vmatmul.mubr.f32.gmra.mrb[0].mxu0 %v385
    %v454 = vpop.f32.mrb[0].mxu0
    %v455 = vadd.f32 0.0, %v454
    %v456 = vpop.f32.mrb[0].mxu0
    %457 = vdwg.mxu0
    %v458 = vadd.f32 %v387, %v455
    %v459 = vtanh.pop %v458
    %s460 = scalar_lea.vmem [#allocation2], 24
    %v461 = vld [vmem:[%s460] sm:$0xff]
    %462 = vmatprep.subr.mxu0 0.0
    %463 = vmatpush1.msra.mxu0 %v224
    %464 = vmatprep.subr.mxu0 0.0
    %465 = vmatpush1.msra.mxu0 %v225
    %466 = vmatprep.subr.mxu0 0.0
    %467 = vmatpush1.msra.mxu0 %v226
    %468 = vmatprep.subr.mxu0 0.0
    %469 = vmatpush1.msra.mxu0 %v227
    %470 = vmatprep.subr.mxu0 0.0
    %471 = vmatpush1.msra.mxu0 %v228
    %472 = vmatprep.subr.mxu0 0.0
    %473 = vmatpush1.msra.mxu0 %v229
    %474 = vmatprep.subr.mxu0 0.0
    %475 = vmatpush1.msra.mxu0 %v230
    %476 = vmatprep.subr.mxu0 0.0
    %477 = vmatpush1.msra.mxu0 %v231
    %478 = vmatprep.subr.mxu0 0.0
    %479 = vmatpush1.msra.mxu0 %v232
    %480 = vmatprep.subr.mxu0 0.0
    %481 = vmatpush1.msra.mxu0 %v233
    %482 = vmatprep.subr.mxu0 0.0
    %483 = vmatpush1.msra.mxu0 %v234
    %484 = vmatprep.subr.mxu0 0.0
    %485 = vmatpush1.msra.mxu0 %v235
    %486 = vmatprep.subr.mxu0 0.0
    %487 = vmatpush1.msra.mxu0 %v236
    %488 = vmatprep.subr.mxu0 0.0
    %489 = vmatpush1.msra.mxu0 %v237
    %490 = vmatprep.subr.mxu0 0.0
    %491 = vmatpush1.msra.mxu0 %v238
    %492 = vmatprep.subr.mxu0 0.0
    %493 = vmatpush1.msra.mxu0 %v239
    %494 = vmatprep.subr.mxu0 0.0
    %495 = vmatpush1.msra.mxu0 0.0
    %496 = vmatprep.subr.mxu0 0.0
    %497 = vmatpush1.msra.mxu0 0.0
    %498 = vmatprep.subr.mxu0 0.0
    %499 = vmatpush1.msra.mxu0 0.0
    %500 = vmatprep.subr.mxu0 0.0
    %501 = vmatpush1.msra.mxu0 0.0
    %502 = vmatprep.subr.mxu0 0.0
    %503 = vmatpush1.msra.mxu0 0.0
    %504 = vmatprep.subr.mxu0 0.0
    %505 = vmatpush1.msra.mxu0 0.0
    %506 = vmatprep.subr.mxu0 0.0
    %507 = vmatpush1.msra.mxu0 0.0
    %508 = vmatprep.subr.mxu0 0.0
    %509 = vmatpush1.msra.mxu0 0.0
    %510 = vmatprep.subr.mxu0 0.0
    %511 = vmatpush1.msra.mxu0 0.0
    %512 = vmatprep.subr.mxu0 0.0
    %513 = vmatpush1.msra.mxu0 0.0
    %514 = vmatprep.subr.mxu0 0.0
    %515 = vmatpush1.msra.mxu0 0.0
    %516 = vmatprep.subr.mxu0 0.0
    %517 = vmatpush1.msra.mxu0 0.0
    %518 = vmatprep.subr.mxu0 0.0
    %519 = vmatpush1.msra.mxu0 0.0
    %520 = vmatprep.subr.mxu0 0.0
    %521 = vmatpush1.msra.mxu0 0.0
    %522 = vmatprep.subr.mxu0 0.0
    %523 = vmatpush1.msra.mxu0 0.0
    %524 = vmatprep.subr.mxu0 0.0
    %525 = vmatpush1.msra.mxu0 0.0
    %526 = vmatprep.mubr.f32.mxu0 0.0
    %527 = vmatmul.mubr.f32.gmra.mrb[0].mxu0 %v459
    %v528 = vpop.f32.mrb[0].mxu0
    %v529 = vadd.f32 0.0, %v528
    %v530 = vpop.f32.mrb[0].mxu0
    %531 = vdwg.mxu0
    %v532 = vadd.f32 %v461, %v529
    %v533 = vtanh.pop %v532
    %s534 = scalar_lea.vmem [#allocation2], 32
    %v535 = vld [vmem:[%s534] sm:$0xff]
    %536 = vmatprep.subr.mxu0 0.0
    %537 = vmatpush1.msra.mxu0 %v224
    %538 = vmatprep.subr.mxu0 0.0
    %539 = vmatpush1.msra.mxu0 %v225
    %540 = vmatprep.subr.mxu0 0.0
    %541 = vmatpush1.msra.mxu0 %v226
    %542 = vmatprep.subr.mxu0 0.0
    %543 = vmatpush1.msra.mxu0 %v227
    %544 = vmatprep.subr.mxu0 0.0
    %545 = vmatpush1.msra.mxu0 %v228
    %546 = vmatprep.subr.mxu0 0.0
    %547 = vmatpush1.msra.mxu0 %v229
    %548 = vmatprep.subr.mxu0 0.0
    %549 = vmatpush1.msra.mxu0 %v230
    %550 = vmatprep.subr.mxu0 0.0
    %551 = vmatpush1.msra.mxu0 %v231
    %552 = vmatprep.subr.mxu0 0.0
    %553 = vmatpush1.msra.mxu0 %v232
    %554 = vmatprep.subr.mxu0 0.0
    %555 = vmatpush1.msra.mxu0 %v233
    %556 = vmatprep.subr.mxu0 0.0
    %557 = vmatpush1.msra.mxu0 %v234
    %558 = vmatprep.subr.mxu0 0.0
    %559 = vmatpush1.msra.mxu0 %v235
    %560 = vmatprep.subr.mxu0 0.0
    %561 = vmatpush1.msra.mxu0 %v236
    %562 = vmatprep.subr.mxu0 0.0
    %563 = vmatpush1.msra.mxu0 %v237
    %564 = vmatprep.subr.mxu0 0.0
    %565 = vmatpush1.msra.mxu0 %v238
    %566 = vmatprep.subr.mxu0 0.0
    %567 = vmatpush1.msra.mxu0 %v239
    %568 = vmatprep.subr.mxu0 0.0
    %569 = vmatpush1.msra.mxu0 0.0
    %570 = vmatprep.subr.mxu0 0.0
    %571 = vmatpush1.msra.mxu0 0.0
    %572 = vmatprep.subr.mxu0 0.0
    %573 = vmatpush1.msra.mxu0 0.0
    %574 = vmatprep.subr.mxu0 0.0
    %575 = vmatpush1.msra.mxu0 0.0
    %576 = vmatprep.subr.mxu0 0.0
    %577 = vmatpush1.msra.mxu0 0.0
    %578 = vmatprep.subr.mxu0 0.0
    %579 = vmatpush1.msra.mxu0 0.0
    %580 = vmatprep.subr.mxu0 0.0
    %581 = vmatpush1.msra.mxu0 0.0
    %582 = vmatprep.subr.mxu0 0.0
    %583 = vmatpush1.msra.mxu0 0.0
    %584 = vmatprep.subr.mxu0 0.0
    %585 = vmatpush1.msra.mxu0 0.0
    %586 = vmatprep.subr.mxu0 0.0
    %587 = vmatpush1.msra.mxu0 0.0
    %588 = vmatprep.subr.mxu0 0.0
    %589 = vmatpush1.msra.mxu0 0.0
    %590 = vmatprep.subr.mxu0 0.0
    %591 = vmatpush1.msra.mxu0 0.0
    %592 = vmatprep.subr.mxu0 0.0
    %593 = vmatpush1.msra.mxu0 0.0
    %594 = vmatprep.subr.mxu0 0.0
    %595 = vmatpush1.msra.mxu0 0.0
    %596 = vmatprep.subr.mxu0 0.0
    %597 = vmatpush1.msra.mxu0 0.0
    %598 = vmatprep.subr.mxu0 0.0
    %599 = vmatpush1.msra.mxu0 0.0
    %600 = vmatprep.mubr.f32.mxu0 0.0
    %601 = vmatmul.mubr.f32.gmra.mrb[0].mxu0 %v533
    %v602 = vpop.f32.mrb[0].mxu0
    %v603 = vadd.f32 0.0, %v602
    %v604 = vpop.f32.mrb[0].mxu0
    %605 = vdwg.mxu0
    %v606 = vadd.f32 %v535, %v603
    %v607 = vtanh.pop %v606
    %s608 = scalar_lea.vmem [#allocation2], 40
    %v609 = vld [vmem:[%s608] sm:$0xff]
    %610 = vmatprep.subr.mxu0 0.0
    %611 = vmatpush1.msra.mxu0 %v224
    %612 = vmatprep.subr.mxu0 0.0
    %613 = vmatpush1.msra.mxu0 %v225
    %614 = vmatprep.subr.mxu0 0.0
    %615 = vmatpush1.msra.mxu0 %v226
    %616 = vmatprep.subr.mxu0 0.0
    %617 = vmatpush1.msra.mxu0 %v227
    %618 = vmatprep.subr.mxu0 0.0
    %619 = vmatpush1.msra.mxu0 %v228
    %620 = vmatprep.subr.mxu0 0.0
    %621 = vmatpush1.msra.mxu0 %v229
    %622 = vmatprep.subr.mxu0 0.0
    %623 = vmatpush1.msra.mxu0 %v230
    %624 = vmatprep.subr.mxu0 0.0
    %625 = vmatpush1.msra.mxu0 %v231
    %626 = vmatprep.subr.mxu0 0.0
    %627 = vmatpush1.msra.mxu0 %v232
    %628 = vmatprep.subr.mxu0 0.0
    %629 = vmatpush1.msra.mxu0 %v233
    %630 = vmatprep.subr.mxu0 0.0
    %631 = vmatpush1.msra.mxu0 %v234
    %632 = vmatprep.subr.mxu0 0.0
    %633 = vmatpush1.msra.mxu0 %v235
    %634 = vmatprep.subr.mxu0 0.0
    %635 = vmatpush1.msra.mxu0 %v236
    %636 = vmatprep.subr.mxu0 0.0
    %637 = vmatpush1.msra.mxu0 %v237
    %638 = vmatprep.subr.mxu0 0.0
    %639 = vmatpush1.msra.mxu0 %v238
    %640 = vmatprep.subr.mxu0 0.0
    %641 = vmatpush1.msra.mxu0 %v239
    %642 = vmatprep.subr.mxu0 0.0
    %643 = vmatpush1.msra.mxu0 0.0
    %644 = vmatprep.subr.mxu0 0.0
    %645 = vmatpush1.msra.mxu0 0.0
    %646 = vmatprep.subr.mxu0 0.0
    %647 = vmatpush1.msra.mxu0 0.0
    %648 = vmatprep.subr.mxu0 0.0
    %649 = vmatpush1.msra.mxu0 0.0
    %650 = vmatprep.subr.mxu0 0.0
    %651 = vmatpush1.msra.mxu0 0.0
    %652 = vmatprep.subr.mxu0 0.0
    %653 = vmatpush1.msra.mxu0 0.0
    %654 = vmatprep.subr.mxu0 0.0
    %655 = vmatpush1.msra.mxu0 0.0
    %656 = vmatprep.subr.mxu0 0.0
    %657 = vmatpush1.msra.mxu0 0.0
    %658 = vmatprep.subr.mxu0 0.0
    %659 = vmatpush1.msra.mxu0 0.0
    %660 = vmatprep.subr.mxu0 0.0
    %661 = vmatpush1.msra.mxu0 0.0
    %662 = vmatprep.subr.mxu0 0.0
    %663 = vmatpush1.msra.mxu0 0.0
    %664 = vmatprep.subr.mxu0 0.0
    %665 = vmatpush1.msra.mxu0 0.0
    %666 = vmatprep.subr.mxu0 0.0
    %667 = vmatpush1.msra.mxu0 0.0
    %668 = vmatprep.subr.mxu0 0.0
    %669 = vmatpush1.msra.mxu0 0.0
    %670 = vmatprep.subr.mxu0 0.0
    %671 = vmatpush1.msra.mxu0 0.0
    %672 = vmatprep.subr.mxu0 0.0
    %673 = vmatpush1.msra.mxu0 0.0
    %674 = vmatprep.mubr.f32.mxu0 0.0
    %675 = vmatmul.mubr.f32.gmra.mrb[0].mxu0 %v607
    %v676 = vpop.f32.mrb[0].mxu0
    %v677 = vadd.f32 0.0, %v676
    %v678 = vpop.f32.mrb[0].mxu0
    %679 = vdwg.mxu0
    %v680 = vadd.f32 %v609, %v677
    %v681 = vtanh.pop %v680
    %s682 = scalar_lea.vmem [#allocation2], 48
    %v683 = vld [vmem:[%s682] sm:$0xff]
    %684 = vmatprep.subr.mxu0 0.0
    %685 = vmatpush1.msra.mxu0 %v224
    %686 = vmatprep.subr.mxu0 0.0
    %687 = vmatpush1.msra.mxu0 %v225
    %688 = vmatprep.subr.mxu0 0.0
    %689 = vmatpush1.msra.mxu0 %v226
    %690 = vmatprep.subr.mxu0 0.0
    %691 = vmatpush1.msra.mxu0 %v227
    %692 = vmatprep.subr.mxu0 0.0
    %693 = vmatpush1.msra.mxu0 %v228
    %694 = vmatprep.subr.mxu0 0.0
    %695 = vmatpush1.msra.mxu0 %v229
    %696 = vmatprep.subr.mxu0 0.0
    %697 = vmatpush1.msra.mxu0 %v230
    %698 = vmatprep.subr.mxu0 0.0
    %699 = vmatpush1.msra.mxu0 %v231
    %700 = vmatprep.subr.mxu0 0.0
    %701 = vmatpush1.msra.mxu0 %v232
    %702 = vmatprep.subr.mxu0 0.0
    %703 = vmatpush1.msra.mxu0 %v233
    %704 = vmatprep.subr.mxu0 0.0
    %705 = vmatpush1.msra.mxu0 %v234
    %706 = vmatprep.subr.mxu0 0.0
    %707 = vmatpush1.msra.mxu0 %v235
    %708 = vmatprep.subr.mxu0 0.0
    %709 = vmatpush1.msra.mxu0 %v236
    %710 = vmatprep.subr.mxu0 0.0
    %711 = vmatpush1.msra.mxu0 %v237
    %712 = vmatprep.subr.mxu0 0.0
    %713 = vmatpush1.msra.mxu0 %v238
    %714 = vmatprep.subr.mxu0 0.0
    %715 = vmatpush1.msra.mxu0 %v239
    %716 = vmatprep.subr.mxu0 0.0
    %717 = vmatpush1.msra.mxu0 0.0
    %718 = vmatprep.subr.mxu0 0.0
    %719 = vmatpush1.msra.mxu0 0.0
    %720 = vmatprep.subr.mxu0 0.0
    %721 = vmatpush1.msra.mxu0 0.0
    %722 = vmatprep.subr.mxu0 0.0
    %723 = vmatpush1.msra.mxu0 0.0
    %724 = vmatprep.subr.mxu0 0.0
    %725 = vmatpush1.msra.mxu0 0.0
    %726 = vmatprep.subr.mxu0 0.0
    %727 = vmatpush1.msra.mxu0 0.0
    %728 = vmatprep.subr.mxu0 0.0
    %729 = vmatpush1.msra.mxu0 0.0
    %730 = vmatprep.subr.mxu0 0.0
    %731 = vmatpush1.msra.mxu0 0.0
    %732 = vmatprep.subr.mxu0 0.0
    %733 = vmatpush1.msra.mxu0 0.0
    %734 = vmatprep.subr.mxu0 0.0
    %735 = vmatpush1.msra.mxu0 0.0
    %736 = vmatprep.subr.mxu0 0.0
    %737 = vmatpush1.msra.mxu0 0.0
    %738 = vmatprep.subr.mxu0 0.0
    %739 = vmatpush1.msra.mxu0 0.0
    %740 = vmatprep.subr.mxu0 0.0
    %741 = vmatpush1.msra.mxu0 0.0
    %742 = vmatprep.subr.mxu0 0.0
    %743 = vmatpush1.msra.mxu0 0.0
    %744 = vmatprep.subr.mxu0 0.0
    %745 = vmatpush1.msra.mxu0 0.0
    %746 = vmatprep.subr.mxu0 0.0
    %747 = vmatpush1.msra.mxu0 0.0
    %748 = vmatprep.mubr.f32.mxu0 0.0
    %749 = vmatmul.mubr.f32.gmra.mrb[0].mxu0 %v681
    %v750 = vpop.f32.mrb[0].mxu0
    %v751 = vadd.f32 0.0, %v750
    %v752 = vpop.f32.mrb[0].mxu0
    %753 = vdwg.mxu0
    %v754 = vadd.f32 %v683, %v751
    %v755 = vtanh.pop %v754
    %s756 = scalar_lea.vmem [#allocation2], 56
    %v757 = vld [vmem:[%s756] sm:$0xff]
    %758 = vmatprep.subr.mxu0 0.0
    %759 = vmatpush1.msra.mxu0 %v224
    %760 = vmatprep.subr.mxu0 0.0
    %761 = vmatpush1.msra.mxu0 %v225
    %762 = vmatprep.subr.mxu0 0.0
    %763 = vmatpush1.msra.mxu0 %v226
    %764 = vmatprep.subr.mxu0 0.0
    %765 = vmatpush1.msra.mxu0 %v227
    %766 = vmatprep.subr.mxu0 0.0
    %767 = vmatpush1.msra.mxu0 %v228
    %768 = vmatprep.subr.mxu0 0.0
    %769 = vmatpush1.msra.mxu0 %v229
    %770 = vmatprep.subr.mxu0 0.0
    %771 = vmatpush1.msra.mxu0 %v230
    %772 = vmatprep.subr.mxu0 0.0
    %773 = vmatpush1.msra.mxu0 %v231
    %774 = vmatprep.subr.mxu0 0.0
    %775 = vmatpush1.msra.mxu0 %v232
    %776 = vmatprep.subr.mxu0 0.0
    %777 = vmatpush1.msra.mxu0 %v233
    %778 = vmatprep.subr.mxu0 0.0
    %779 = vmatpush1.msra.mxu0 %v234
    %780 = vmatprep.subr.mxu0 0.0
    %781 = vmatpush1.msra.mxu0 %v235
    %782 = vmatprep.subr.mxu0 0.0
    %783 = vmatpush1.msra.mxu0 %v236
    %784 = vmatprep.subr.mxu0 0.0
    %785 = vmatpush1.msra.mxu0 %v237
    %786 = vmatprep.subr.mxu0 0.0
    %787 = vmatpush1.msra.mxu0 %v238
    %788 = vmatprep.subr.mxu0 0.0
    %789 = vmatpush1.msra.mxu0 %v239
    %790 = vmatprep.subr.mxu0 0.0
    %791 = vmatpush1.msra.mxu0 0.0
    %792 = vmatprep.subr.mxu0 0.0
    %793 = vmatpush1.msra.mxu0 0.0
    %794 = vmatprep.subr.mxu0 0.0
    %795 = vmatpush1.msra.mxu0 0.0
    %796 = vmatprep.subr.mxu0 0.0
    %797 = vmatpush1.msra.mxu0 0.0
    %798 = vmatprep.subr.mxu0 0.0
    %799 = vmatpush1.msra.mxu0 0.0
    %800 = vmatprep.subr.mxu0 0.0
    %801 = vmatpush1.msra.mxu0 0.0
    %802 = vmatprep.subr.mxu0 0.0
    %803 = vmatpush1.msra.mxu0 0.0
    %804 = vmatprep.subr.mxu0 0.0
    %805 = vmatpush1.msra.mxu0 0.0
    %806 = vmatprep.subr.mxu0 0.0
    %807 = vmatpush1.msra.mxu0 0.0
    %808 = vmatprep.subr.mxu0 0.0
    %809 = vmatpush1.msra.mxu0 0.0
    %810 = vmatprep.subr.mxu0 0.0
    %811 = vmatpush1.msra.mxu0 0.0
    %812 = vmatprep.subr.mxu0 0.0
    %813 = vmatpush1.msra.mxu0 0.0
    %814 = vmatprep.subr.mxu0 0.0
    %815 = vmatpush1.msra.mxu0 0.0
    %816 = vmatprep.subr.mxu0 0.0
    %817 = vmatpush1.msra.mxu0 0.0
    %818 = vmatprep.subr.mxu0 0.0
    %819 = vmatpush1.msra.mxu0 0.0
    %820 = vmatprep.subr.mxu0 0.0
    %821 = vmatpush1.msra.mxu0 0.0
    %822 = vmatprep.mubr.f32.mxu0 0.0
    %823 = vmatmul.mubr.f32.gmra.mrb[0].mxu0 %v755
    %v824 = vpop.f32.mrb[0].mxu0
    %v825 = vadd.f32 0.0, %v824
    %v826 = vpop.f32.mrb[0].mxu0
    %827 = vdwg.mxu0
    %v828 = vadd.f32 %v757, %v825
    %v829 = vtanh.pop %v828
    %v830 = vld [vmem:[#allocation9] sm:$0xff]
    %v831 = vld [vmem:[#allocation9 + $0x8] sm:$0xff]
    %v832 = vld [vmem:[#allocation9 + $0x10] sm:$0xff]
    %v833 = vld [vmem:[#allocation9 + $0x18] sm:$0xff]
    %v834 = vld [vmem:[#allocation9 + $0x20] sm:$0xff]
    %v835 = vld [vmem:[#allocation9 + $0x28] sm:$0xff]
    %v836 = vld [vmem:[#allocation9 + $0x30] sm:$0xff]
    %v837 = vld [vmem:[#allocation9 + $0x38] sm:$0xff]
    %v838 = vld [vmem:[#allocation9 + $0x40] sm:$0xff]
    %v839 = vld [vmem:[#allocation9 + $0x48] sm:$0xff]
    %v840 = vld [vmem:[#allocation9 + $0x50] sm:$0xff]
    %v841 = vld [vmem:[#allocation9 + $0x58] sm:$0xff]
    %v842 = vld [vmem:[#allocation9 + $0x60] sm:$0xff]
    %v843 = vld [vmem:[#allocation9 + $0x68] sm:$0xff]
    %v844 = vld [vmem:[#allocation9 + $0x70] sm:$0xff]
    %v845 = vld [vmem:[#allocation9 + $0x78] sm:$0xff]
    %v846 = vld [vmem:[%s5] sm:$0x1]
    %v848 = vlaneseq
    %v849 = vshrl.u32 %v848, 7
    %v850 = vsub.s32 0, %v849
    %v851 = vrot.slane %v846, %v850
    %853 = vmatprep.subr.mxu0 0.0
    %854 = vmatpush1.msra.mxu0 %v830
    %855 = vmatprep.subr.mxu0 0.0
    %856 = vmatpush1.msra.mxu0 %v831
    %857 = vmatprep.subr.mxu0 0.0
    %858 = vmatpush1.msra.mxu0 %v832
    %859 = vmatprep.subr.mxu0 0.0
    %860 = vmatpush1.msra.mxu0 %v833
    %861 = vmatprep.subr.mxu0 0.0
    %862 = vmatpush1.msra.mxu0 %v834
    %863 = vmatprep.subr.mxu0 0.0
    %864 = vmatpush1.msra.mxu0 %v835
    %865 = vmatprep.subr.mxu0 0.0
    %866 = vmatpush1.msra.mxu0 %v836
    %867 = vmatprep.subr.mxu0 0.0
    %868 = vmatpush1.msra.mxu0 %v837
    %869 = vmatprep.subr.mxu0 0.0
    %870 = vmatpush1.msra.mxu0 %v838
    %871 = vmatprep.subr.mxu0 0.0
    %872 = vmatpush1.msra.mxu0 %v839
    %873 = vmatprep.subr.mxu0 0.0
    %874 = vmatpush1.msra.mxu0 %v840
    %875 = vmatprep.subr.mxu0 0.0
    %876 = vmatpush1.msra.mxu0 %v841
    %877 = vmatprep.subr.mxu0 0.0
    %878 = vmatpush1.msra.mxu0 %v842
    %879 = vmatprep.subr.mxu0 0.0
    %880 = vmatpush1.msra.mxu0 %v843
    %881 = vmatprep.subr.mxu0 0.0
    %882 = vmatpush1.msra.mxu0 %v844
    %883 = vmatprep.subr.mxu0 0.0
    %884 = vmatpush1.msra.mxu0 %v845
    %885 = vmatprep.subr.mxu0 0.0
    %886 = vmatpush1.msra.mxu0 0.0
    %887 = vmatprep.subr.mxu0 0.0
    %888 = vmatpush1.msra.mxu0 0.0
    %889 = vmatprep.subr.mxu0 0.0
    %890 = vmatpush1.msra.mxu0 0.0
    %891 = vmatprep.subr.mxu0 0.0
    %892 = vmatpush1.msra.mxu0 0.0
    %893 = vmatprep.subr.mxu0 0.0
    %894 = vmatpush1.msra.mxu0 0.0
    %895 = vmatprep.subr.mxu0 0.0
    %896 = vmatpush1.msra.mxu0 0.0
    %897 = vmatprep.subr.mxu0 0.0
    %898 = vmatpush1.msra.mxu0 0.0
    %899 = vmatprep.subr.mxu0 0.0
    %900 = vmatpush1.msra.mxu0 0.0
    %901 = vmatprep.subr.mxu0 0.0
    %902 = vmatpush1.msra.mxu0 0.0
    %903 = vmatprep.subr.mxu0 0.0
    %904 = vmatpush1.msra.mxu0 0.0
    %905 = vmatprep.subr.mxu0 0.0
    %906 = vmatpush1.msra.mxu0 0.0
    %907 = vmatprep.subr.mxu0 0.0
    %908 = vmatpush1.msra.mxu0 0.0
    %909 = vmatprep.subr.mxu0 0.0
    %910 = vmatpush1.msra.mxu0 0.0
    %911 = vmatprep.subr.mxu0 0.0
    %912 = vmatpush1.msra.mxu0 0.0
    %913 = vmatprep.subr.mxu0 0.0
    %914 = vmatpush1.msra.mxu0 0.0
    %915 = vmatprep.subr.mxu0 0.0
    %916 = vmatpush1.msra.mxu0 0.0
    %917 = vmatprep.mubr.f32.mxu0 0.0
    %918 = vmatmul.mubr.f32.gmra.mrb[0].mxu0 %v829
    %v919 = vpop.f32.mrb[0].mxu0
    %v920 = vadd.f32 %v851, %v919
    %v921 = vpop.f32.mrb[0].mxu0
    %922 = vdwg.mxu0
    %923 = vst [vmem:[#allocation11] sm:$0xff] %v920
    // Predicated region
    $region42: #{tpu_custom_call.1} parent=1 // pred_check
      _
    $region43: #{tpu_custom_call.1} parent=1 // pred_check_branch
      %925 = sbr.rel (0) target = $region45
    $region44: #{tpu_custom_call.1} parent=1 // pred_region
      %s927 = ssub.s32 128, 128
      %928 = vsyncadd [#allocation5], %s927
      %s930 = sshll.u32 [#allocation11], 4
      %s931 = int_to_ptr.vmem [resolvable:$true] %s930
      %933 = dma.vmem_to_hbm [thread:$0]  %s931, 128, %s6, [#allocation5]
    $region45: #{tpu_custom_call.1} parent=1 // pred_fallthru
      _
    // Predicated region
    $region46: #{tpu_custom_call.1} parent=1 // pred_check
      _
    $region47: #{tpu_custom_call.1} parent=1 // pred_check_branch
      %935 = sbr.rel (0) target = $region49
    $region48: #{tpu_custom_call.1} parent=1 // pred_region
      %936 = dma.done [#allocation5], 128
    $region49: #{tpu_custom_call.1} parent=1 // pred_fallthru
      _
    %937 = vsyncpa [#allocation4], 1
    %938 = vsyncpa [#allocation7], 1
    %939 = vsyncpa [#allocation10], 1
    %940 = vsyncpa [#allocation5], 1

</llo_original>
